<compile_context>
chip_gen: v7x
topology: tpu7x:2x2x1
jax: 0.10.0
libtpu: 0.0.40
codegen_flags: <defaults>
</compile_context>

<pallas_src>
import jax
import jax.numpy as jnp
from jax.experimental import pallas as pl
from jax.experimental.pallas import tpu as pltpu

_LANE = 128


def _round_up(n: int, m: int) -> int:
    return ((n + m - 1) // m) * m


def _mlp_kernel(t_ref, x_ref, w1_ref, w2_ref, b2_ref, w3_ref, b3_ref,
                out_ref, slab_ref):
    tb, d_x = x_ref.shape
    lane = slab_ref.shape[1]

    # Build the fused [x | one_hot(t)] slab in VMEM:
    #   lanes [0, d_x)   <- x (already bf16)
    #   lane  d_x + t    <- 1.0  (b1 is folded into these rows of W1)
    #   other lanes      <- 0.0  (matching zero rows padded into W1)
    t = t_ref[...]                                                   # (tb, 1) int32
    lane_id = jax.lax.broadcasted_iota(jnp.int32, (tb, lane), 1)
    slab_ref[...] = (lane_id == (t + d_x)).astype(jnp.bfloat16)      # one-hot
    slab_ref[:, :d_x] = x_ref[...]                                   # covariates

    # Layer 1 (+ folded b1) and ReLU.
    h = jnp.dot(slab_ref[...], w1_ref[...], preferred_element_type=jnp.float32)
    h = jnp.maximum(h, 0.0)

    # Layer 2.
    h = jnp.dot(h.astype(jnp.bfloat16), w2_ref[...],
                preferred_element_type=jnp.float32)
    h = jnp.maximum(h + b2_ref[...], 0.0)

    # Layer 3: narrow (d_y-lane) head; masked store but only d_y lanes of HBM
    # writeback instead of a padded 128-wide slab.
    o = jnp.dot(h.astype(jnp.bfloat16), w3_ref[...],
                preferred_element_type=jnp.float32)
    out_ref[...] = (o + b3_ref[...]).astype(out_ref.dtype)


def _prepare_params(params, d_x, k, lane=_LANE):
    """Pad / fuse the outcome-MLP params exactly as the kernel consumes them."""
    w1, b1, w2, b2, w3, b3 = params
    h1, h2 = w1.shape[1], w2.shape[1]
    d_y = w3.shape[1]
    assert w1.shape[0] == d_x + k
    assert d_x + k <= lane, "one-hot-into-padding fusion requires d_x + k <= 128"

    h1_p = _round_up(h1, lane)
    h2_p = _round_up(h2, lane)
    f32, bf16 = jnp.float32, jnp.bfloat16

    b1 = b1.reshape(1, h1).astype(f32)
    # Fold b1 into the treatment (one-hot) rows of W1: exactly one one-hot lane
    # is 1 per row, so one_hot @ (W1_t + b1) == one_hot @ W1_t + b1.
    w1_eff = jnp.concatenate([w1[:d_x].astype(f32), w1[d_x:].astype(f32) + b1],
                             axis=0)                                  # (d_x+k, h1)
    w1_p = jnp.zeros((lane, h1_p), f32).at[:d_x + k, :h1].set(w1_eff).astype(bf16)

    w2_p = jnp.zeros((h1_p, h2_p), f32).at[:h1, :h2].set(w2.astype(f32)).astype(bf16)
    b2_p = jnp.zeros((1, h2_p), f32).at[:, :h2].set(b2.reshape(1, h2).astype(f32))
    w3_p = jnp.zeros((h2_p, d_y), f32).at[:h2, :].set(w3.astype(f32)).astype(bf16)
    b3_p = b3.reshape(1, d_y).astype(f32)
    return w1_p, w2_p, b2_p, w3_p, b3_p


def fixmatch_forward(x, t, params, k, *, tile_b=512):
    """FixMatch.forward: y_hat = outcome_MLP([x, one_hot(t, k)])."""
    B, d_x = x.shape
    d_y = params[4].shape[1]

    w1_p, w2_p, b2_p, w3_p, b3_p = _prepare_params(params, d_x, k, _LANE)
    h1_p, h2_p = w1_p.shape[1], w2_p.shape[1]

    # Batch tile: large enough to amortize per-grid-step overhead (and to fill
    # v6e's 256-row MXU at large B), but small enough that the grid keeps >= 2
    # "parallel" steps so both v7x TensorCores get work.
    half = _round_up(max(B // 2, 1), 8)
    tb = _round_up(max(8, min(tile_b, half)), 8)
    b_p = _round_up(B, tb)
    grid = (b_p // tb,)

    # Narrow, bf16 covariates and int32 treatments in HBM; the 128-lane slab is
    # built in-kernel in VMEM.  Padded batch rows carry x=0, t=0: they produce
    # well-defined garbage rows that are sliced off below.
    x_p = jnp.zeros((b_p, d_x), jnp.bfloat16).at[:B].set(x.astype(jnp.bfloat16))
    t_p = jnp.zeros((b_p, 1), jnp.int32).at[:B, 0].set(t.astype(jnp.int32))

    const = lambda i: (0, 0)    # VMEM-resident weights / biases
    rows = lambda i: (i, 0)     # batch-tiled arrays

    flops = 2 * b_p * (_LANE * h1_p + h1_p * h2_p + h2_p * d_y)
    bytes_accessed = int(
        sum(a.size * a.dtype.itemsize
            for a in (t_p, x_p, w1_p, w2_p, b2_p, w3_p, b3_p))
        + b_p * d_y * 4)

    out = pl.pallas_call(
        _mlp_kernel,
        out_shape=jax.ShapeDtypeStruct((b_p, d_y), jnp.float32),
        grid=grid,
        in_specs=[
            pl.BlockSpec((tb, 1), rows),          # t
            pl.BlockSpec((tb, d_x), rows),        # x (narrow, bf16)
            pl.BlockSpec((_LANE, h1_p), const),   # W1 (b1 folded into one-hot rows)
            pl.BlockSpec((h1_p, h2_p), const),    # W2
            pl.BlockSpec((1, h2_p), const),       # b2
            pl.BlockSpec((h2_p, d_y), const),     # W3 (narrow output head)
            pl.BlockSpec((1, d_y), const),        # b3
        ],
        out_specs=pl.BlockSpec((tb, d_y), rows),
        scratch_shapes=[pltpu.VMEM((tb, _LANE), jnp.bfloat16)],
        compiler_params=pltpu.CompilerParams(
            dimension_semantics=("parallel",)),
        cost_estimate=pl.CostEstimate(flops=flops, transcendentals=0,
                                      bytes_accessed=bytes_accessed),
    )(t_p, x_p, w1_p, w2_p, b2_p, w3_p, b3_p)

    return out[:B]


def init_outcome_params(key, d_x, k, d_y, hidden):
    """Synthetic init of outcome-MLP params (shapes per the module __init__)."""
    dims = [d_x + k, *hidden, d_y]
    params = []
    keys = jax.random.split(key, len(dims) - 1)
    for kk, (din, dout) in zip(keys, zip(dims[:-1], dims[1:])):
        scale = 1.0 / jnp.sqrt(jnp.float32(din))
        w = jax.random.uniform(kk, (din, dout), jnp.float32, -scale, scale)
        b = jax.random.uniform(jax.random.fold_in(kk, 1), (1, dout),
                               jnp.float32, -scale, scale)
        params.extend([w, b])
    return tuple(params)


def _reference_forward(x, t, params, k):
    """Pure-JAX reference mirroring the kernel's bf16 operands / f32 accumulation
    (bf16 MXU operands are a deliberate precision downgrade vs. the f32 module)."""
    B, d_x = x.shape
    w1_p, w2_p, b2_p, w3_p, b3_p = _prepare_params(params, d_x, k, _LANE)
    slab = jnp.zeros((B, _LANE), jnp.float32)
    slab = slab.at[:, :d_x].set(x)
    slab = slab.at[jnp.arange(B), d_x + t.astype(jnp.int32)].set(1.0)
    bf = lambda a: a.astype(jnp.bfloat16).astype(jnp.float32)
    hi = jax.lax.Precision.HIGHEST
    h = jnp.maximum(jnp.dot(bf(slab), w1_p.astype(jnp.float32), precision=hi), 0.0)
    h = jnp.maximum(jnp.dot(bf(h), w2_p.astype(jnp.float32), precision=hi) + b2_p, 0.0)
    return jnp.dot(bf(h), w3_p.astype(jnp.float32), precision=hi) + b3_p


if __name__ == "__main__":
    # Small shapes consistent with the module: d_x covariates, k treatments,
    # d_y outcome dim, hidden_dims=(128, 128).
    B, d_x, k, d_y = 256, 4, 2, 1
    hidden = (128, 128)

    key = jax.random.PRNGKey(0)
    kx, kt, kp = jax.random.split(key, 3)
    x = jax.random.normal(kx, (B, d_x), jnp.float32)
    t = jax.random.randint(kt, (B,), 0, k, jnp.int32)
    params = init_outcome_params(kp, d_x, k, d_y, hidden)

    y_hat = fixmatch_forward(x, t, params, k)
    jax.block_until_ready(y_hat)

    ref = _reference_forward(x, t, params, k)
    assert y_hat.shape == (B, d_y), y_hat.shape
    max_err = float(jnp.max(jnp.abs(y_hat - ref)))
    assert jnp.allclose(y_hat, ref, atol=2e-3, rtol=2e-3), max_err

    print("KERNEL_OK")
</pallas_src>

<mosaic_0001>
module attributes {stable_mosaic.version = 11 : i64} {
  func.func @_mlp_kernel(%arg0: i32, %arg1: memref<128x1xi32, #tpu.memory_space<vmem>>, %arg2: memref<128x4xbf16, #tpu.memory_space<vmem>>, %arg3: memref<128x128xbf16, #tpu.memory_space<vmem>>, %arg4: memref<128x128xbf16, #tpu.memory_space<vmem>>, %arg5: memref<1x128xf32, #tpu.memory_space<vmem>>, %arg6: memref<128x1xbf16, #tpu.memory_space<vmem>>, %arg7: memref<1x1xf32, #tpu.memory_space<vmem>>, %arg8: memref<128x1xf32, #tpu.memory_space<vmem>>, %arg9: memref<128x128xbf16, #tpu.memory_space<vmem>>) attributes {dimension_semantics = [#tpu.dimension_semantics<parallel>], iteration_bounds = array<i64: 2>, scalar_prefetch = 0 : i64, scratch_operands = 1 : i64, tpu.core_type = #tpu.core_type<tc>, window_params = [{transform_indices = @transform_0, window_bounds = array<i64: 128, 1>}, {transform_indices = @transform_1, window_bounds = array<i64: 128, 4>}, {pipeline_mode = #tpu.pipeline_mode<synchronous>, transform_indices = @transform_2, window_bounds = array<i64: 128, 128>}, {pipeline_mode = #tpu.pipeline_mode<synchronous>, transform_indices = @transform_3, window_bounds = array<i64: 128, 128>}, {pipeline_mode = #tpu.pipeline_mode<synchronous>, transform_indices = @transform_4, window_bounds = array<i64: 1, 128>}, {pipeline_mode = #tpu.pipeline_mode<synchronous>, transform_indices = @transform_5, window_bounds = array<i64: 128, 1>}, {pipeline_mode = #tpu.pipeline_mode<synchronous>, transform_indices = @transform_6, window_bounds = array<i64: 1, 1>}, {transform_indices = @transform_7, window_bounds = array<i64: 128, 1>}]} {
    %c0 = arith.constant 0 : index
    %c0_0 = arith.constant 0 : index
    %0 = vector.load %arg1[%c0, %c0_0] : memref<128x1xi32, #tpu.memory_space<vmem>>, vector<128x1xi32>
    %1 = tpu.iota {dimensions = array<i32: 1>} : vector<128x128xi32>
    %c4_i32 = arith.constant 4 : i32
    %2 = vector.broadcast %c4_i32 : i32 to vector<128x1xi32>
    %3 = arith.addi %0, %2 : vector<128x1xi32>
    %4 = vector.broadcast %3 : vector<128x1xi32> to vector<128x128xi32>
    %5 = arith.cmpi eq, %1, %4 : vector<128x128xi32>
    %6 = arith.extui %5 : vector<128x128xi1> to vector<128x128xi32>
    %7 = arith.sitofp %6 : vector<128x128xi32> to vector<128x128xf32>
    %8 = arith.truncf %7 : vector<128x128xf32> to vector<128x128xbf16>
    %c0_1 = arith.constant 0 : index
    %c0_2 = arith.constant 0 : index
    %9 = vector.load %arg9[%c0_1, %c0_2] : memref<128x128xbf16, #tpu.memory_space<vmem>>, vector<128x128xbf16>
    tpu.vector_store %arg9[%c0_1, %c0_2], %8 {strides = array<i32>} : memref<128x128xbf16, #tpu.memory_space<vmem>>, vector<128x128xbf16>,
    %c0_3 = arith.constant 0 : index
    %c0_4 = arith.constant 0 : index
    %10 = vector.load %arg2[%c0_3, %c0_4] : memref<128x4xbf16, #tpu.memory_space<vmem>>, vector<128x4xbf16>
    %c0_5 = arith.constant 0 : index
    %c0_6 = arith.constant 0 : index
    %11 = vector.load %arg9[%c0_5, %c0_6] : memref<128x128xbf16, #tpu.memory_space<vmem>>, vector<128x4xbf16>
    tpu.vector_store %arg9[%c0_5, %c0_6], %10 {strides = array<i32>} : memref<128x128xbf16, #tpu.memory_space<vmem>>, vector<128x4xbf16>,
    %c0_7 = arith.constant 0 : index
    %c0_8 = arith.constant 0 : index
    %12 = vector.load %arg9[%c0_7, %c0_8] : memref<128x128xbf16, #tpu.memory_space<vmem>>, vector<128x128xbf16>
    %c0_9 = arith.constant 0 : index
    %c0_10 = arith.constant 0 : index
    %13 = vector.load %arg3[%c0_9, %c0_10] : memref<128x128xbf16, #tpu.memory_space<vmem>>, vector<128x128xbf16>
    %cst = arith.constant dense<0.000000e+00> : vector<128x128xf32>
    %14 = tpu.matmul %12, %13, %cst {dimension_numbers = #tpu.dot_dimension_numbers<[1], [0], [0], [1], [0, 0, 1, 1], [], []>} : vector<128x128xbf16>, vector<128x128xbf16>, vector<128x128xf32> -> vector<128x128xf32>
    %cst_11 = arith.constant 0.000000e+00 : f32
    %15 = vector.broadcast %cst_11 : f32 to vector<128x128xf32>
    %16 = arith.maximumf %14, %15 : vector<128x128xf32>
    %17 = arith.truncf %16 : vector<128x128xf32> to vector<128x128xbf16>
    %c0_12 = arith.constant 0 : index
    %c0_13 = arith.constant 0 : index
    %18 = vector.load %arg4[%c0_12, %c0_13] : memref<128x128xbf16, #tpu.memory_space<vmem>>, vector<128x128xbf16>
    %cst_14 = arith.constant dense<0.000000e+00> : vector<128x128xf32>
    %19 = tpu.matmul %17, %18, %cst_14 {dimension_numbers = #tpu.dot_dimension_numbers<[1], [0], [0], [1], [0, 0, 1, 1], [], []>} : vector<128x128xbf16>, vector<128x128xbf16>, vector<128x128xf32> -> vector<128x128xf32>
    %c0_15 = arith.constant 0 : index
    %c0_16 = arith.constant 0 : index
    %20 = vector.load %arg5[%c0_15, %c0_16] : memref<1x128xf32, #tpu.memory_space<vmem>>, vector<1x128xf32>
    %21 = vector.broadcast %20 : vector<1x128xf32> to vector<128x128xf32>
    %22 = arith.addf %19, %21 : vector<128x128xf32>
    %cst_17 = arith.constant 0.000000e+00 : f32
    %23 = vector.broadcast %cst_17 : f32 to vector<128x128xf32>
    %24 = arith.maximumf %22, %23 : vector<128x128xf32>
    %25 = arith.truncf %24 : vector<128x128xf32> to vector<128x128xbf16>
    %c0_18 = arith.constant 0 : index
    %c0_19 = arith.constant 0 : index
    %26 = vector.load %arg6[%c0_18, %c0_19] : memref<128x1xbf16, #tpu.memory_space<vmem>>, vector<128x1xbf16>
    %cst_20 = arith.constant dense<0.000000e+00> : vector<128x1xf32>
    %27 = tpu.matmul %25, %26, %cst_20 {dimension_numbers = #tpu.dot_dimension_numbers<[1], [0], [0], [1], [0, 0, 1, 1], [], []>} : vector<128x128xbf16>, vector<128x1xbf16>, vector<128x1xf32> -> vector<128x1xf32>
    %c0_21 = arith.constant 0 : index
    %c0_22 = arith.constant 0 : index
    %28 = vector.load %arg7[%c0_21, %c0_22] : memref<1x1xf32, #tpu.memory_space<vmem>>, vector<1x1xf32>
    %29 = vector.broadcast %28 : vector<1x1xf32> to vector<128x1xf32>
    %30 = arith.addf %27, %29 : vector<128x1xf32>
    %c0_23 = arith.constant 0 : index
    %c0_24 = arith.constant 0 : index
    %31 = vector.load %arg8[%c0_23, %c0_24] : memref<128x1xf32, #tpu.memory_space<vmem>>, vector<128x1xf32>
    tpu.vector_store %arg8[%c0_23, %c0_24], %30 {strides = array<i32>} : memref<128x1xf32, #tpu.memory_space<vmem>>, vector<128x1xf32>,
    return
  }
  func.func @transform_0(%arg0: i32) -> (i32, i32) {
    %c0_i32 = arith.constant 0 : i32
    %c0_i32_0 = arith.constant 0 : i32
    return %arg0, %c0_i32 : i32, i32
  }
  func.func @transform_1(%arg0: i32) -> (i32, i32) {
    %c0_i32 = arith.constant 0 : i32
    %c0_i32_0 = arith.constant 0 : i32
    return %arg0, %c0_i32 : i32, i32
  }
  func.func @transform_2(%arg0: i32) -> (i32, i32) {
    %c0_i32 = arith.constant 0 : i32
    %c0_i32_0 = arith.constant 0 : i32
    %c0_i32_1 = arith.constant 0 : i32
    return %c0_i32, %c0_i32_0 : i32, i32
  }
  func.func @transform_3(%arg0: i32) -> (i32, i32) {
    %c0_i32 = arith.constant 0 : i32
    %c0_i32_0 = arith.constant 0 : i32
    %c0_i32_1 = arith.constant 0 : i32
    return %c0_i32, %c0_i32_0 : i32, i32
  }
  func.func @transform_4(%arg0: i32) -> (i32, i32) {
    %c0_i32 = arith.constant 0 : i32
    %c0_i32_0 = arith.constant 0 : i32
    %c0_i32_1 = arith.constant 0 : i32
    return %c0_i32, %c0_i32_0 : i32, i32
  }
  func.func @transform_5(%arg0: i32) -> (i32, i32) {
    %c0_i32 = arith.constant 0 : i32
    %c0_i32_0 = arith.constant 0 : i32
    %c0_i32_1 = arith.constant 0 : i32
    return %c0_i32, %c0_i32_0 : i32, i32
  }
  func.func @transform_6(%arg0: i32) -> (i32, i32) {
    %c0_i32 = arith.constant 0 : i32
    %c0_i32_0 = arith.constant 0 : i32
    %c0_i32_1 = arith.constant 0 : i32
    return %c0_i32, %c0_i32_0 : i32, i32
  }
  func.func @transform_7(%arg0: i32) -> (i32, i32) {
    %c0_i32 = arith.constant 0 : i32
    %c0_i32_0 = arith.constant 0 : i32
    return %arg0, %c0_i32 : i32, i32
  }
}

</mosaic_0001>

<llo_original>
// kernel: tpu_custom_call.1
$region0: #{tpu_custom_call.1}
  #allocation0 [shape = 'u32[]', space=smem, size = 0x4, offset = 0x4, fixed_abs, tag = 'smem constant byte address 0x4 - core index']
  #allocation1 [shape = 'u32[144,128]{1,0:T(1,128)}', space=vmem, size = 0x12000, scoped, tag = 'internal scratch']
  #allocation2 [shape = 'bf16[128,128]{1,0:T(16,128)(2,1)}', space=vmem, size = 0x8000, scoped, tag = 'scratch operand']
  #allocation3 [shape = 'f32[1,1]{1,0:T(1,128)S(1)}', space=vmem, size = 0x200, scoped, tag = 'scoped memory for tpu_custom_call.1']
  %s0 = inlined_call_operand.vmem [shape: s32[256,1], index: 0, kind: input, shape index: {}]
  %s1 = inlined_call_operand.vmem [shape: bf16[256,4], index: 1, kind: input, shape index: {}]
  %s2 = inlined_call_operand.vmem [shape: bf16[128,128], index: 2, kind: input, shape index: {}]
  %s3 = inlined_call_operand.vmem [shape: bf16[128,128], index: 3, kind: input, shape index: {}]
  %s4 = inlined_call_operand.vmem [shape: f32[1,128], index: 4, kind: input, shape index: {}]
  %s5 = inlined_call_operand.vmem [shape: bf16[128,1], index: 5, kind: input, shape index: {}]
  %s6 = inlined_call_operand.<no memory space> [shape: f32[1,1], index: 6, kind: input, shape index: {}]
  %s7 = inlined_call_operand.vmem [shape: f32[256,1], index: 7, kind: output, shape index: {}]
  %s8 = sld [smem:[#allocation0]]
  $region61: #{tpu_custom_call.1} parent=0
    _
  %s10 = ssub.s32 1, %s8
  %s11 = scalar_select 0, %s10, %s8
  %v12 = vstv %s6
  %13 = vst [vmem:[#allocation3] sm:$0x1] %v12
  loop: start=0, step=1, limit=4
  $region2: #{tpu_custom_call.1} parent=0 // loop_pre_header
    _
  $region3: #{tpu_custom_call.1} parent=0 // loop_header
    %s15 = sphi 0, %s19
    %p16 = scmp.ge.s32.totalorder %s15, 4
    %s25 = sphi 0, %s27
    %s28 = sphi 0, %s25
    %s29 = sphi 0, %s28
    %s45 = sphi 0, %s29
    %s51 = sphi 0, %s53
    %s54 = sphi 0, %s51
    %s55 = sphi 0, %s54
    %s71 = sphi 0, %s55
    %s75 = sphi 0, %s75
    %s77 = sphi 0, %s75
    %s78 = sphi 0, %s77
    %s92 = sphi 0, %s78
    %s96 = sphi 0, %s96
    %s98 = sphi 0, %s96
    %s99 = sphi 0, %s98
    %s113 = sphi 0, %s99
    %s117 = sphi 0, %s117
    %s119 = sphi 0, %s117
    %s120 = sphi 0, %s119
    %s134 = sphi 0, %s120
    %s138 = sphi 0, %s138
    %s140 = sphi 0, %s138
    %s141 = sphi 0, %s140
    %s155 = sphi 0, %s141
    %s159 = sphi 0, %s159
    %s161 = sphi 0, %s159
    %s162 = sphi 0, %s161
    %s176 = sphi 0, %s162
    %s182 = sphi 0, %s184
    %s185 = sphi 0, %s182
    %s186 = sphi 0, %s185
    %s202 = sphi 0, %s186
  $region4: #{tpu_custom_call.1} parent=0 // loop_header_branch
    %18 = sbr.rel (%p16) target = $region8
  $region5: #{tpu_custom_call.1} parent=0 // loop_body
    %s20 = ssub.s32 %s15, 1
    %s21 = ssub.s32 %s15, 2
    %s22 = sadd.s32 %s15, 1
    %s23 = ssub.s32 %s15, %s22
    %p24 = scmp.eq.s32.totalorder %s23, 0
    %s26 = sadd.s32 %s25, 1
    %s27 = scalar_select %p24, %s25, %s26
    %p30 = pneg %p24
    %p31 = scmp.eq.s32.totalorder %s15, 1
    %p32 = por %p30, %p31
    %p33 = scmp.ne.s32.totalorder %s25, %s28
    %p34 = scmp.eq.s32.totalorder %s15, 0
    %p35 = por %p33, %p34
    %p36 = scmp.ne.s32.totalorder %s25, %s28
    %p37 = scmp.eq.s32.totalorder %s20, 1
    %p38 = por %p36, %p37
    %p39 = scmp.ne.s32.totalorder %s28, %s29
    %p40 = scmp.eq.s32.totalorder %s20, 0
    %p41 = por %p39, %p40
    %p42 = scmp.ne.s32.totalorder %s28, %s29
    %p43 = scmp.eq.s32.totalorder %s21, 1
    %p44 = por %p42, %p43
    %p46 = scmp.ne.s32.totalorder %s29, %s45
    %p47 = scmp.eq.s32.totalorder %s21, 0
    %p48 = por %p46, %p47
    %s49 = ssub.s32 %s15, %s22
    %p50 = scmp.eq.s32.totalorder %s49, 0
    %s52 = sadd.s32 %s51, 1
    %s53 = scalar_select %p50, %s51, %s52
    %p56 = pneg %p50
    %p57 = scmp.eq.s32.totalorder %s15, 1
    %p58 = por %p56, %p57
    %p59 = scmp.ne.s32.totalorder %s51, %s54
    %p60 = scmp.eq.s32.totalorder %s15, 0
    %p61 = por %p59, %p60
    %p62 = scmp.ne.s32.totalorder %s51, %s54
    %p63 = scmp.eq.s32.totalorder %s20, 1
    %p64 = por %p62, %p63
    %p65 = scmp.ne.s32.totalorder %s54, %s55
    %p66 = scmp.eq.s32.totalorder %s20, 0
    %p67 = por %p65, %p66
    %p68 = scmp.ne.s32.totalorder %s54, %s55
    %p69 = scmp.eq.s32.totalorder %s21, 1
    %p70 = por %p68, %p69
    %p72 = scmp.ne.s32.totalorder %s55, %s71
    %p73 = scmp.eq.s32.totalorder %s21, 0
    %p74 = por %p72, %p73
    %s76 = sadd.s32 %s75, 1
    %p79 = scmp.eq.s32.totalorder %s15, 1
    %p80 = scmp.ne.s32.totalorder %s75, %s77
    %p81 = scmp.eq.s32.totalorder %s15, 0
    %p82 = por %p80, %p81
    %p83 = scmp.ne.s32.totalorder %s75, %s77
    %p84 = scmp.eq.s32.totalorder %s20, 1
    %p85 = por %p83, %p84
    %p86 = scmp.ne.s32.totalorder %s77, %s78
    %p87 = scmp.eq.s32.totalorder %s20, 0
    %p88 = por %p86, %p87
    %p89 = scmp.ne.s32.totalorder %s77, %s78
    %p90 = scmp.eq.s32.totalorder %s21, 1
    %p91 = por %p89, %p90
    %p93 = scmp.ne.s32.totalorder %s78, %s92
    %p94 = scmp.eq.s32.totalorder %s21, 0
    %p95 = por %p93, %p94
    %s97 = sadd.s32 %s96, 1
    %p100 = scmp.eq.s32.totalorder %s15, 1
    %p101 = scmp.ne.s32.totalorder %s96, %s98
    %p102 = scmp.eq.s32.totalorder %s15, 0
    %p103 = por %p101, %p102
    %p104 = scmp.ne.s32.totalorder %s96, %s98
    %p105 = scmp.eq.s32.totalorder %s20, 1
    %p106 = por %p104, %p105
    %p107 = scmp.ne.s32.totalorder %s98, %s99
    %p108 = scmp.eq.s32.totalorder %s20, 0
    %p109 = por %p107, %p108
    %p110 = scmp.ne.s32.totalorder %s98, %s99
    %p111 = scmp.eq.s32.totalorder %s21, 1
    %p112 = por %p110, %p111
    %p114 = scmp.ne.s32.totalorder %s99, %s113
    %p115 = scmp.eq.s32.totalorder %s21, 0
    %p116 = por %p114, %p115
    %s118 = sadd.s32 %s117, 1
    %p121 = scmp.eq.s32.totalorder %s15, 1
    %p122 = scmp.ne.s32.totalorder %s117, %s119
    %p123 = scmp.eq.s32.totalorder %s15, 0
    %p124 = por %p122, %p123
    %p125 = scmp.ne.s32.totalorder %s117, %s119
    %p126 = scmp.eq.s32.totalorder %s20, 1
    %p127 = por %p125, %p126
    %p128 = scmp.ne.s32.totalorder %s119, %s120
    %p129 = scmp.eq.s32.totalorder %s20, 0
    %p130 = por %p128, %p129
    %p131 = scmp.ne.s32.totalorder %s119, %s120
    %p132 = scmp.eq.s32.totalorder %s21, 1
    %p133 = por %p131, %p132
    %p135 = scmp.ne.s32.totalorder %s120, %s134
    %p136 = scmp.eq.s32.totalorder %s21, 0
    %p137 = por %p135, %p136
    %s139 = sadd.s32 %s138, 1
    %p142 = scmp.eq.s32.totalorder %s15, 1
    %p143 = scmp.ne.s32.totalorder %s138, %s140
    %p144 = scmp.eq.s32.totalorder %s15, 0
    %p145 = por %p143, %p144
    %p146 = scmp.ne.s32.totalorder %s138, %s140
    %p147 = scmp.eq.s32.totalorder %s20, 1
    %p148 = por %p146, %p147
    %p149 = scmp.ne.s32.totalorder %s140, %s141
    %p150 = scmp.eq.s32.totalorder %s20, 0
    %p151 = por %p149, %p150
    %p152 = scmp.ne.s32.totalorder %s140, %s141
    %p153 = scmp.eq.s32.totalorder %s21, 1
    %p154 = por %p152, %p153
    %p156 = scmp.ne.s32.totalorder %s141, %s155
    %p157 = scmp.eq.s32.totalorder %s21, 0
    %p158 = por %p156, %p157
    %s160 = sadd.s32 %s159, 1
    %p163 = scmp.eq.s32.totalorder %s15, 1
    %p164 = scmp.ne.s32.totalorder %s159, %s161
    %p165 = scmp.eq.s32.totalorder %s15, 0
    %p166 = por %p164, %p165
    %p167 = scmp.ne.s32.totalorder %s159, %s161
    %p168 = scmp.eq.s32.totalorder %s20, 1
    %p169 = por %p167, %p168
    %p170 = scmp.ne.s32.totalorder %s161, %s162
    %p171 = scmp.eq.s32.totalorder %s20, 0
    %p172 = por %p170, %p171
    %p173 = scmp.ne.s32.totalorder %s161, %s162
    %p174 = scmp.eq.s32.totalorder %s21, 1
    %p175 = por %p173, %p174
    %p177 = scmp.ne.s32.totalorder %s162, %s176
    %p178 = scmp.eq.s32.totalorder %s21, 0
    %p179 = por %p177, %p178
    %s180 = ssub.s32 %s15, %s22
    %p181 = scmp.eq.s32.totalorder %s180, 0
    %s183 = sadd.s32 %s182, 1
    %s184 = scalar_select %p181, %s182, %s183
    %p187 = pneg %p181
    %p188 = scmp.eq.s32.totalorder %s15, 1
    %p189 = por %p187, %p188
    %p190 = scmp.ne.s32.totalorder %s182, %s185
    %p191 = scmp.eq.s32.totalorder %s15, 0
    %p192 = por %p190, %p191
    %p193 = scmp.ne.s32.totalorder %s182, %s185
    %p194 = scmp.eq.s32.totalorder %s20, 1
    %p195 = por %p193, %p194
    %p196 = scmp.ne.s32.totalorder %s185, %s186
    %p197 = scmp.eq.s32.totalorder %s20, 0
    %p198 = por %p196, %p197
    %p199 = scmp.ne.s32.totalorder %s185, %s186
    %p200 = scmp.eq.s32.totalorder %s21, 1
    %p201 = por %p199, %p200
    %p203 = scmp.ne.s32.totalorder %s186, %s202
    %p204 = scmp.eq.s32.totalorder %s21, 0
    %p205 = por %p203, %p204
    %p206 = scmp.le.s32.totalorder 1, %s15
    %p207 = scmp.lt.s32.totalorder %s15, 3
    %p208 = pnand %p206, %p207
    %p209 = pneg %p208
    // Predicated region
    $region9: #{tpu_custom_call.1} parent=5 // pred_check
      _
    $region10: #{tpu_custom_call.1} parent=5 // pred_check_branch
      %211 = sbr.rel (%p208) target = $region12
    $region11: #{tpu_custom_call.1} parent=5 // pred_region
      %s212 = ssub.s32 %s15, 1
      // Predicated region
      $region13: #{tpu_custom_call.1} parent=11 // pred_check
        %p213 = pneg %p88
      $region14: #{tpu_custom_call.1} parent=11 // pred_check_branch
        %215 = sbr.rel (%p213) target = $region16
      $region15: #{tpu_custom_call.1} parent=11 // pred_region
        _
      $region16: #{tpu_custom_call.1} parent=11 // pred_fallthru
        _
      // Predicated region
      $region17: #{tpu_custom_call.1} parent=11 // pred_check
        %p216 = pneg %p109
      $region18: #{tpu_custom_call.1} parent=11 // pred_check_branch
        %218 = sbr.rel (%p216) target = $region20
      $region19: #{tpu_custom_call.1} parent=11 // pred_region
        _
      $region20: #{tpu_custom_call.1} parent=11 // pred_fallthru
        _
      // Predicated region
      $region21: #{tpu_custom_call.1} parent=11 // pred_check
        %p219 = pneg %p130
      $region22: #{tpu_custom_call.1} parent=11 // pred_check_branch
        %221 = sbr.rel (%p219) target = $region24
      $region23: #{tpu_custom_call.1} parent=11 // pred_region
        _
      $region24: #{tpu_custom_call.1} parent=11 // pred_fallthru
        _
      // Predicated region
      $region25: #{tpu_custom_call.1} parent=11 // pred_check
        %p222 = pneg %p151
      $region26: #{tpu_custom_call.1} parent=11 // pred_check_branch
        %224 = sbr.rel (%p222) target = $region28
      $region27: #{tpu_custom_call.1} parent=11 // pred_region
        _
      $region28: #{tpu_custom_call.1} parent=11 // pred_fallthru
        _
      // Predicated region
      $region29: #{tpu_custom_call.1} parent=11 // pred_check
        %p225 = pneg %p172
      $region30: #{tpu_custom_call.1} parent=11 // pred_check_branch
        %227 = sbr.rel (%p225) target = $region32
      $region31: #{tpu_custom_call.1} parent=11 // pred_region
        _
      $region32: #{tpu_custom_call.1} parent=11 // pred_fallthru
        _
    $region12: #{tpu_custom_call.1} parent=5 // pred_fallthru
      _
    %p228 = scmp.lt.s32.totalorder %s15, 2
    // Predicated region
    $region33: #{tpu_custom_call.1} parent=5 // pred_check
      %p229 = pneg %p228
    $region34: #{tpu_custom_call.1} parent=5 // pred_check_branch
      %231 = sbr.rel (%p229) target = $region36
    $region35: #{tpu_custom_call.1} parent=5 // pred_region
      // Predicated region
      $region37: #{tpu_custom_call.1} parent=35 // pred_check
        %p232 = pneg %p35
      $region38: #{tpu_custom_call.1} parent=35 // pred_check_branch
        %234 = sbr.rel (%p232) target = $region40
      $region39: #{tpu_custom_call.1} parent=35 // pred_region
        %s235 = smul.u32 16, %s15
        %p236 = scmp.lt.s32.totalorder %s235, 31
        %s237 = scalar_select %p236, %s235, 31
        %s238 = smul.addr %s237, 8
        %s239 = scalar_lea.vmem %s0, %s238
        %s240 = smul.u32 16, %s15
      $region40: #{tpu_custom_call.1} parent=35 // pred_fallthru
        _
      // Predicated region
      $region41: #{tpu_custom_call.1} parent=35 // pred_check
        %p241 = pneg %p61
      $region42: #{tpu_custom_call.1} parent=35 // pred_check_branch
        %243 = sbr.rel (%p241) target = $region44
      $region43: #{tpu_custom_call.1} parent=35 // pred_region
        %s244 = smul.u32 16, %s15
        %p245 = scmp.lt.s32.totalorder %s244, 31
        %s246 = scalar_select %p245, %s244, 31
        %s247 = smul.addr %s246, 4
        %s248 = scalar_lea.vmem %s1, %s247
        %s249 = smul.u32 16, %s15
      $region44: #{tpu_custom_call.1} parent=35 // pred_fallthru
        _
    $region36: #{tpu_custom_call.1} parent=5 // pred_fallthru
      _
    %p250 = scmp.le.s32.totalorder 1, %s15
    %p251 = scmp.lt.s32.totalorder %s15, 3
    %p252 = pnand %p250, %p251
    %p253 = pneg %p252
    // Predicated region
    $region45: #{tpu_custom_call.1} parent=5 // pred_check
      _
    $region46: #{tpu_custom_call.1} parent=5 // pred_check_branch
      %255 = sbr.rel (%p252) target = $region48
    $region47: #{tpu_custom_call.1} parent=5 // pred_region
      %s256 = ssub.s32 %s15, 1
      %s257 = smul.u32 16, %s20
      %p258 = scmp.lt.s32.totalorder %s257, 31
      %s259 = scalar_select %p258, %s257, 31
      %s260 = smul.addr %s259, 8
      %s261 = scalar_lea.vmem %s0, %s260
      %p262 = pneg %p41
      %p263 = pneg %p38
      %s264 = smul.u32 16, %s20
      %p265 = scmp.lt.s32.totalorder %s264, 31
      %s266 = scalar_select %p265, %s264, 31
      %s267 = smul.addr %s266, 4
      %s268 = scalar_lea.vmem %s1, %s267
      %p269 = pneg %p67
      %p270 = pneg %p64
      %p271 = pneg %p88
      %p272 = pneg %p85
      %p273 = pneg %p109
      %p274 = pneg %p106
      %p275 = pneg %p130
      %p276 = pneg %p127
      %p277 = pneg %p151
      %p278 = pneg %p148
      %p279 = pneg %p172
      %p280 = pneg %p169
      %p281 = pneg %p198
      %p282 = pneg %p195
      %s283 = smul.u32 16, %s20
      %p284 = scmp.lt.s32.totalorder %s283, 31
      %s285 = scalar_select %p284, %s283, 31
      %s286 = smul.addr %s285, 8
      %s287 = scalar_lea.vmem %s7, %s286
      %s288 = smul.u32 16, %s20
      %p289 = scmp.lt.s32.totalorder %s288, 31
      %s290 = scalar_select %p289, %s288, 31
      %s291 = smul.addr %s290, 8
      %s292 = scalar_lea.vmem %s0, %s291
      %s293 = smul.u32 16, %s20
      %s294 = smul.u32 16, %s20
      %p295 = scmp.lt.s32.totalorder %s294, 31
      %s296 = scalar_select %p295, %s294, 31
      %s297 = smul.addr %s296, 4
      %s298 = scalar_lea.vmem %s1, %s297
      %s299 = smul.u32 16, %s20
      %s300 = smul.u32 16, %s20
      %p301 = scmp.lt.s32.totalorder %s300, 31
      %s302 = scalar_select %p301, %s300, 31
      %s303 = smul.addr %s302, 8
      %s304 = scalar_lea.vmem %s7, %s303
      %s305 = smul.u32 16, %s20
      %v307 = vld [vmem:[%s292] sm:$0xff]
      %v308 = vld [vmem:[%s292 + $0x8] sm:$0xff]
      %v309 = vld [vmem:[%s292 + $0x10] sm:$0xff]
      %v310 = vld [vmem:[%s292 + $0x18] sm:$0xff]
      %v311 = vld [vmem:[%s292 + $0x20] sm:$0xff]
      %v312 = vld [vmem:[%s292 + $0x28] sm:$0xff]
      %v313 = vld [vmem:[%s292 + $0x30] sm:$0xff]
      %v314 = vld [vmem:[%s292 + $0x38] sm:$0xff]
      %v315 = vld [vmem:[%s292 + $0x40] sm:$0xff]
      %v316 = vld [vmem:[%s292 + $0x48] sm:$0xff]
      %v317 = vld [vmem:[%s292 + $0x50] sm:$0xff]
      %v318 = vld [vmem:[%s292 + $0x58] sm:$0xff]
      %v319 = vld [vmem:[%s292 + $0x60] sm:$0xff]
      %v320 = vld [vmem:[%s292 + $0x68] sm:$0xff]
      %v321 = vld [vmem:[%s292 + $0x70] sm:$0xff]
      %v322 = vld [vmem:[%s292 + $0x78] sm:$0xff]
      %v323 = vlaneseq
      %v324 = vand.u32 %v323, 127
      %v325 = vadd.s32 %v307, 4
      %v326 = vadd.s32 %v308, 4
      %v327 = vadd.s32 %v309, 4
      %v328 = vadd.s32 %v310, 4
      %v329 = vadd.s32 %v311, 4
      %v330 = vadd.s32 %v312, 4
      %v331 = vadd.s32 %v313, 4
      %v332 = vadd.s32 %v314, 4
      %v333 = vadd.s32 %v315, 4
      %v334 = vadd.s32 %v316, 4
      %v335 = vadd.s32 %v317, 4
      %v336 = vadd.s32 %v318, 4
      %v337 = vadd.s32 %v319, 4
      %v338 = vadd.s32 %v320, 4
      %v339 = vadd.s32 %v321, 4
      %v340 = vadd.s32 %v322, 4
      %341 = vset.pattern.permute.xlu0 0
      %342 = vperm.xlu0 %341, %v325
      %v343 = vpop.permute.xlu0 %342
      %344 = vset.pattern.permute.xlu0 0
      %345 = vperm.xlu0 %344, %v326
      %v346 = vpop.permute.xlu0 %345
      %347 = vset.pattern.permute.xlu0 0
      %348 = vperm.xlu0 %347, %v327
      %v349 = vpop.permute.xlu0 %348
      %350 = vset.pattern.permute.xlu0 0
      %351 = vperm.xlu0 %350, %v328
      %v352 = vpop.permute.xlu0 %351
      %353 = vset.pattern.permute.xlu0 0
      %354 = vperm.xlu0 %353, %v329
      %v355 = vpop.permute.xlu0 %354
      %356 = vset.pattern.permute.xlu0 0
      %357 = vperm.xlu0 %356, %v330
      %v358 = vpop.permute.xlu0 %357
      %359 = vset.pattern.permute.xlu0 0
      %360 = vperm.xlu0 %359, %v331
      %v361 = vpop.permute.xlu0 %360
      %362 = vset.pattern.permute.xlu0 0
      %363 = vperm.xlu0 %362, %v332
      %v364 = vpop.permute.xlu0 %363
      %365 = vset.pattern.permute.xlu0 0
      %366 = vperm.xlu0 %365, %v333
      %v367 = vpop.permute.xlu0 %366
      %368 = vset.pattern.permute.xlu0 0
      %369 = vperm.xlu0 %368, %v334
      %v370 = vpop.permute.xlu0 %369
      %371 = vset.pattern.permute.xlu0 0
      %372 = vperm.xlu0 %371, %v335
      %v373 = vpop.permute.xlu0 %372
      %374 = vset.pattern.permute.xlu0 0
      %375 = vperm.xlu0 %374, %v336
      %v376 = vpop.permute.xlu0 %375
      %377 = vset.pattern.permute.xlu0 0
      %378 = vperm.xlu0 %377, %v337
      %v379 = vpop.permute.xlu0 %378
      %380 = vset.pattern.permute.xlu0 0
      %381 = vperm.xlu0 %380, %v338
      %v382 = vpop.permute.xlu0 %381
      %383 = vset.pattern.permute.xlu0 0
      %384 = vperm.xlu0 %383, %v339
      %v385 = vpop.permute.xlu0 %384
      %386 = vset.pattern.permute.xlu0 0
      %387 = vperm.xlu0 %386, %v340
      %v388 = vpop.permute.xlu0 %387
      %vm389 = vcmp.eq.s32.totalorder %v324, %v343
      %vm390 = vcmp.eq.s32.totalorder %v324, %v346
      %vm391 = vcmp.eq.s32.totalorder %v324, %v349
      %vm392 = vcmp.eq.s32.totalorder %v324, %v352
      %vm393 = vcmp.eq.s32.totalorder %v324, %v355
      %vm394 = vcmp.eq.s32.totalorder %v324, %v358
      %vm395 = vcmp.eq.s32.totalorder %v324, %v361
      %vm396 = vcmp.eq.s32.totalorder %v324, %v364
      %vm397 = vcmp.eq.s32.totalorder %v324, %v367
      %vm398 = vcmp.eq.s32.totalorder %v324, %v370
      %vm399 = vcmp.eq.s32.totalorder %v324, %v373
      %vm400 = vcmp.eq.s32.totalorder %v324, %v376
      %vm401 = vcmp.eq.s32.totalorder %v324, %v379
      %vm402 = vcmp.eq.s32.totalorder %v324, %v382
      %vm403 = vcmp.eq.s32.totalorder %v324, %v385
      %vm404 = vcmp.eq.s32.totalorder %v324, %v388
      %v405 = vsel %vm389, 1, 0
      %v406 = vsel %vm390, 1, 0
      %v407 = vsel %vm391, 1, 0
      %v408 = vsel %vm392, 1, 0
      %v409 = vsel %vm393, 1, 0
      %v410 = vsel %vm394, 1, 0
      %v411 = vsel %vm395, 1, 0
      %v412 = vsel %vm396, 1, 0
      %v413 = vsel %vm397, 1, 0
      %v414 = vsel %vm398, 1, 0
      %v415 = vsel %vm399, 1, 0
      %v416 = vsel %vm400, 1, 0
      %v417 = vsel %vm401, 1, 0
      %v418 = vsel %vm402, 1, 0
      %v419 = vsel %vm403, 1, 0
      %v420 = vsel %vm404, 1, 0
      %v421 = vcvt.s32.f32 %v405
      %v422 = vcvt.s32.f32 %v406
      %v423 = vcvt.s32.f32 %v407
      %v424 = vcvt.s32.f32 %v408
      %v425 = vcvt.s32.f32 %v409
      %v426 = vcvt.s32.f32 %v410
      %v427 = vcvt.s32.f32 %v411
      %v428 = vcvt.s32.f32 %v412
      %v429 = vcvt.s32.f32 %v413
      %v430 = vcvt.s32.f32 %v414
      %v431 = vcvt.s32.f32 %v415
      %v432 = vcvt.s32.f32 %v416
      %v433 = vcvt.s32.f32 %v417
      %v434 = vcvt.s32.f32 %v418
      %v435 = vcvt.s32.f32 %v419
      %v436 = vcvt.s32.f32 %v420
      %v437 = vpack.c.bf16 %v422, %v421
      %v438 = vpack.c.bf16 %v424, %v423
      %v439 = vpack.c.bf16 %v426, %v425
      %v440 = vpack.c.bf16 %v428, %v427
      %v441 = vpack.c.bf16 %v430, %v429
      %v442 = vpack.c.bf16 %v432, %v431
      %v443 = vpack.c.bf16 %v434, %v433
      %v444 = vpack.c.bf16 %v436, %v435
      %445 = vst [vmem:[#allocation2] sm:$0xff] %v437
      %446 = vst [vmem:[#allocation2 + $0x8] sm:$0xff] %v438
      %447 = vst [vmem:[#allocation2 + $0x10] sm:$0xff] %v439
      %448 = vst [vmem:[#allocation2 + $0x18] sm:$0xff] %v440
      %449 = vst [vmem:[#allocation2 + $0x20] sm:$0xff] %v441
      %450 = vst [vmem:[#allocation2 + $0x28] sm:$0xff] %v442
      %451 = vst [vmem:[#allocation2 + $0x30] sm:$0xff] %v443
      %452 = vst [vmem:[#allocation2 + $0x38] sm:$0xff] %v444
      %v453 = vld [vmem:[%s298] sm:$0xf]
      %v454 = vld [vmem:[%s298 + $0x4] sm:$0xf]
      %v455 = vld [vmem:[%s298 + $0x8] sm:$0xf]
      %v456 = vld [vmem:[%s298 + $0xc] sm:$0xf]
      %v457 = vld [vmem:[%s298 + $0x10] sm:$0xf]
      %v458 = vld [vmem:[%s298 + $0x14] sm:$0xf]
      %v459 = vld [vmem:[%s298 + $0x18] sm:$0xf]
      %v460 = vld [vmem:[%s298 + $0x1c] sm:$0xf]
      %v461 = vld [vmem:[%s298 + $0x20] sm:$0xf]
      %v462 = vld [vmem:[%s298 + $0x24] sm:$0xf]
      %v463 = vld [vmem:[%s298 + $0x28] sm:$0xf]
      %v464 = vld [vmem:[%s298 + $0x2c] sm:$0xf]
      %v465 = vld [vmem:[%s298 + $0x30] sm:$0xf]
      %v466 = vld [vmem:[%s298 + $0x34] sm:$0xf]
      %v467 = vld [vmem:[%s298 + $0x38] sm:$0xf]
      %v468 = vld [vmem:[%s298 + $0x3c] sm:$0xf]
      %v485 = vunpack.c.l.b16 %v453
      %v486 = vunpack.c.l.b16 %v454
      %v487 = vunpack.c.l.b16 %v455
      %v488 = vunpack.c.l.b16 %v456
      %v489 = vunpack.c.l.b16 %v457
      %v490 = vunpack.c.l.b16 %v458
      %v491 = vunpack.c.l.b16 %v459
      %v492 = vunpack.c.l.b16 %v460
      %v493 = vunpack.c.l.b16 %v461
      %v494 = vunpack.c.l.b16 %v462
      %v495 = vunpack.c.l.b16 %v463
      %v496 = vunpack.c.l.b16 %v464
      %v497 = vunpack.c.l.b16 %v465
      %v498 = vunpack.c.l.b16 %v466
      %v499 = vunpack.c.l.b16 %v467
      %v500 = vunpack.c.l.b16 %v468
      %v501 = vpack.c.b16 %v486, %v485
      %v502 = vpack.c.b16 %v488, %v487
      %v503 = vpack.c.b16 %v490, %v489
      %v504 = vpack.c.b16 %v492, %v491
      %v505 = vpack.c.b16 %v494, %v493
      %v506 = vpack.c.b16 %v496, %v495
      %v507 = vpack.c.b16 %v498, %v497
      %v508 = vpack.c.b16 %v500, %v499
      %vm517 = vcmask 31744
      %518 = vst.msk [vmem:[#allocation2] sm:$0xff] %vm517, %v501
      %519 = vst.msk [vmem:[#allocation2 + $0x8] sm:$0xff] %vm517, %v502
      %520 = vst.msk [vmem:[#allocation2 + $0x10] sm:$0xff] %vm517, %v503
      %521 = vst.msk [vmem:[#allocation2 + $0x18] sm:$0xff] %vm517, %v504
      %522 = vst.msk [vmem:[#allocation2 + $0x20] sm:$0xff] %vm517, %v505
      %523 = vst.msk [vmem:[#allocation2 + $0x28] sm:$0xff] %vm517, %v506
      %524 = vst.msk [vmem:[#allocation2 + $0x30] sm:$0xff] %vm517, %v507
      %525 = vst.msk [vmem:[#allocation2 + $0x38] sm:$0xff] %vm517, %v508
      %v526 = vld [vmem:[#allocation2] sm:$0xff]
      %v527 = vld [vmem:[#allocation2 + $0x8] sm:$0xff]
      %v528 = vld [vmem:[#allocation2 + $0x10] sm:$0xff]
      %v529 = vld [vmem:[#allocation2 + $0x18] sm:$0xff]
      %v530 = vld [vmem:[#allocation2 + $0x20] sm:$0xff]
      %v531 = vld [vmem:[#allocation2 + $0x28] sm:$0xff]
      %v532 = vld [vmem:[#allocation2 + $0x30] sm:$0xff]
      %v533 = vld [vmem:[#allocation2 + $0x38] sm:$0xff]
      %v534 = vld [vmem:[%s2] sm:$0xf]
      %v535 = vld [vmem:[%s2 + $0x4] sm:$0xf]
      %v536 = vld [vmem:[%s2 + $0x8] sm:$0xf]
      %v537 = vld [vmem:[%s2 + $0xc] sm:$0xf]
      %v538 = vld [vmem:[%s2 + $0x10] sm:$0xf]
      %v539 = vld [vmem:[%s2 + $0x14] sm:$0xf]
      %v540 = vld [vmem:[%s2 + $0x18] sm:$0xf]
      %v541 = vld [vmem:[%s2 + $0x1c] sm:$0xf]
      %v542 = vld [vmem:[%s2 + $0x20] sm:$0xf]
      %v543 = vld [vmem:[%s2 + $0x24] sm:$0xf]
      %v544 = vld [vmem:[%s2 + $0x28] sm:$0xf]
      %v545 = vld [vmem:[%s2 + $0x2c] sm:$0xf]
      %v546 = vld [vmem:[%s2 + $0x30] sm:$0xf]
      %v547 = vld [vmem:[%s2 + $0x34] sm:$0xf]
      %v548 = vld [vmem:[%s2 + $0x38] sm:$0xf]
      %v549 = vld [vmem:[%s2 + $0x3c] sm:$0xf]
      %v566 = vunpack.c.l.b16 %v534
      %v567 = vunpack.c.l.b16 %v535
      %v568 = vunpack.c.l.b16 %v536
      %v569 = vunpack.c.l.b16 %v537
      %v570 = vunpack.c.l.b16 %v538
      %v571 = vunpack.c.l.b16 %v539
      %v572 = vunpack.c.l.b16 %v540
      %v573 = vunpack.c.l.b16 %v541
      %v574 = vunpack.c.l.b16 %v542
      %v575 = vunpack.c.l.b16 %v543
      %v576 = vunpack.c.l.b16 %v544
      %v577 = vunpack.c.l.b16 %v545
      %v578 = vunpack.c.l.b16 %v546
      %v579 = vunpack.c.l.b16 %v547
      %v580 = vunpack.c.l.b16 %v548
      %v581 = vunpack.c.l.b16 %v549
      %v582 = vpack.c.b16 %v567, %v566
      %v583 = vpack.c.b16 %v569, %v568
      %v584 = vpack.c.b16 %v571, %v570
      %v585 = vpack.c.b16 %v573, %v572
      %v586 = vpack.c.b16 %v575, %v574
      %v587 = vpack.c.b16 %v577, %v576
      %v588 = vpack.c.b16 %v579, %v578
      %v589 = vpack.c.b16 %v581, %v580
      %598 = vmatprep.subr.bf16.mxu0 0
      %599 = vmatpush1.bf16.msra.mxu0 %v582
      %600 = vmatprep.subr.bf16.mxu0 0
      %601 = vmatpush1.bf16.msra.mxu0 %v583
      %602 = vmatprep.subr.bf16.mxu0 0
      %603 = vmatpush1.bf16.msra.mxu0 %v584
      %604 = vmatprep.subr.bf16.mxu0 0
      %605 = vmatpush1.bf16.msra.mxu0 %v585
      %606 = vmatprep.subr.bf16.mxu0 0
      %607 = vmatpush1.bf16.msra.mxu0 %v586
      %608 = vmatprep.subr.bf16.mxu0 0
      %609 = vmatpush1.bf16.msra.mxu0 %v587
      %610 = vmatprep.subr.bf16.mxu0 0
      %611 = vmatpush1.bf16.msra.mxu0 %v588
      %612 = vmatprep.subr.bf16.mxu0 0
      %613 = vmatpush1.bf16.msra.mxu0 %v589
      %614 = vmatprep.subr.bf16.mxu0 0
      %615 = vmatpush1.bf16.msra.mxu0 0
      %616 = vmatprep.subr.bf16.mxu0 0
      %617 = vmatpush1.bf16.msra.mxu0 0
      %618 = vmatprep.subr.bf16.mxu0 0
      %619 = vmatpush1.bf16.msra.mxu0 0
      %620 = vmatprep.subr.bf16.mxu0 0
      %621 = vmatpush1.bf16.msra.mxu0 0
      %622 = vmatprep.subr.bf16.mxu0 0
      %623 = vmatpush1.bf16.msra.mxu0 0
      %624 = vmatprep.subr.bf16.mxu0 0
      %625 = vmatpush1.bf16.msra.mxu0 0
      %626 = vmatprep.subr.bf16.mxu0 0
      %627 = vmatpush1.bf16.msra.mxu0 0
      %628 = vmatprep.subr.bf16.mxu0 0
      %629 = vmatpush1.bf16.msra.mxu0 0
      %630 = vmatprep.mubr.bf16.mxu0 0
      %631 = vmatmul.mubr.bf16.gmra.mrb[0].mxu0 %v526
      %v632 = vpop.f32.mrb[0].mxu0
      %v633 = vadd.f32 0.0, %v632
      %v634 = vpop.f32.mrb[0].mxu0
      %v635 = vpop.f32.mrb[0].mxu0
      %v636 = vadd.f32 0.0, %v635
      %v637 = vpop.f32.mrb[0].mxu0
      %638 = vmatprep.mubr.bf16.mxu0 0
      %639 = vmatmul.mubr.bf16.gmra.mrb[0].mxu0 %v527
      %v640 = vpop.f32.mrb[0].mxu0
      %v641 = vadd.f32 0.0, %v640
      %v642 = vpop.f32.mrb[0].mxu0
      %v643 = vpop.f32.mrb[0].mxu0
      %v644 = vadd.f32 0.0, %v643
      %v645 = vpop.f32.mrb[0].mxu0
      %646 = vmatprep.mubr.bf16.mxu0 0
      %647 = vmatmul.mubr.bf16.gmra.mrb[0].mxu0 %v528
      %v648 = vpop.f32.mrb[0].mxu0
      %v649 = vadd.f32 0.0, %v648
      %v650 = vpop.f32.mrb[0].mxu0
      %v651 = vpop.f32.mrb[0].mxu0
      %v652 = vadd.f32 0.0, %v651
      %v653 = vpop.f32.mrb[0].mxu0
      %654 = vmatprep.mubr.bf16.mxu0 0
      %655 = vmatmul.mubr.bf16.gmra.mrb[0].mxu0 %v529
      %v656 = vpop.f32.mrb[0].mxu0
      %v657 = vadd.f32 0.0, %v656
      %v658 = vpop.f32.mrb[0].mxu0
      %v659 = vpop.f32.mrb[0].mxu0
      %v660 = vadd.f32 0.0, %v659
      %v661 = vpop.f32.mrb[0].mxu0
      %662 = vmatprep.mubr.bf16.mxu0 0
      %663 = vmatmul.mubr.bf16.gmra.mrb[0].mxu0 %v530
      %v664 = vpop.f32.mrb[0].mxu0
      %v665 = vadd.f32 0.0, %v664
      %v666 = vpop.f32.mrb[0].mxu0
      %v667 = vpop.f32.mrb[0].mxu0
      %v668 = vadd.f32 0.0, %v667
      %v669 = vpop.f32.mrb[0].mxu0
      %670 = vmatprep.mubr.bf16.mxu0 0
      %671 = vmatmul.mubr.bf16.gmra.mrb[0].mxu0 %v531
      %v672 = vpop.f32.mrb[0].mxu0
      %v673 = vadd.f32 0.0, %v672
      %v674 = vpop.f32.mrb[0].mxu0
      %v675 = vpop.f32.mrb[0].mxu0
      %v676 = vadd.f32 0.0, %v675
      %v677 = vpop.f32.mrb[0].mxu0
      %678 = vmatprep.mubr.bf16.mxu0 0
      %679 = vmatmul.mubr.bf16.gmra.mrb[0].mxu0 %v532
      %v680 = vpop.f32.mrb[0].mxu0
      %v681 = vadd.f32 0.0, %v680
      %v682 = vpop.f32.mrb[0].mxu0
      %v683 = vpop.f32.mrb[0].mxu0
      %v684 = vadd.f32 0.0, %v683
      %v685 = vpop.f32.mrb[0].mxu0
      %686 = vmatprep.mubr.bf16.mxu0 0
      %687 = vmatmul.mubr.bf16.gmra.mrb[0].mxu0 %v533
      %v688 = vpop.f32.mrb[0].mxu0
      %v689 = vadd.f32 0.0, %v688
      %v690 = vpop.f32.mrb[0].mxu0
      %v691 = vpop.f32.mrb[0].mxu0
      %v692 = vadd.f32 0.0, %v691
      %v693 = vpop.f32.mrb[0].mxu0
      %694 = vdwg.mxu0
      %v695 = vmax.f32 %v633, 0.0
      %v696 = vmax.f32 %v636, 0.0
      %v697 = vmax.f32 %v641, 0.0
      %v698 = vmax.f32 %v644, 0.0
      %v699 = vmax.f32 %v649, 0.0
      %v700 = vmax.f32 %v652, 0.0
      %v701 = vmax.f32 %v657, 0.0
      %v702 = vmax.f32 %v660, 0.0
      %v703 = vmax.f32 %v665, 0.0
      %v704 = vmax.f32 %v668, 0.0
      %v705 = vmax.f32 %v673, 0.0
      %v706 = vmax.f32 %v676, 0.0
      %v707 = vmax.f32 %v681, 0.0
      %v708 = vmax.f32 %v684, 0.0
      %v709 = vmax.f32 %v689, 0.0
      %v710 = vmax.f32 %v692, 0.0
      %v711 = vpack.c.bf16 %v696, %v695
      %v712 = vpack.c.bf16 %v698, %v697
      %v713 = vpack.c.bf16 %v700, %v699
      %v714 = vpack.c.bf16 %v702, %v701
      %v715 = vpack.c.bf16 %v704, %v703
      %v716 = vpack.c.bf16 %v706, %v705
      %v717 = vpack.c.bf16 %v708, %v707
      %v718 = vpack.c.bf16 %v710, %v709
      %v719 = vld [vmem:[%s3] sm:$0xf]
      %v720 = vld [vmem:[%s3 + $0x4] sm:$0xf]
      %v721 = vld [vmem:[%s3 + $0x8] sm:$0xf]
      %v722 = vld [vmem:[%s3 + $0xc] sm:$0xf]
      %v723 = vld [vmem:[%s3 + $0x10] sm:$0xf]
      %v724 = vld [vmem:[%s3 + $0x14] sm:$0xf]
      %v725 = vld [vmem:[%s3 + $0x18] sm:$0xf]
      %v726 = vld [vmem:[%s3 + $0x1c] sm:$0xf]
      %v727 = vld [vmem:[%s3 + $0x20] sm:$0xf]
      %v728 = vld [vmem:[%s3 + $0x24] sm:$0xf]
      %v729 = vld [vmem:[%s3 + $0x28] sm:$0xf]
      %v730 = vld [vmem:[%s3 + $0x2c] sm:$0xf]
      %v731 = vld [vmem:[%s3 + $0x30] sm:$0xf]
      %v732 = vld [vmem:[%s3 + $0x34] sm:$0xf]
      %v733 = vld [vmem:[%s3 + $0x38] sm:$0xf]
      %v734 = vld [vmem:[%s3 + $0x3c] sm:$0xf]
      %v735 = vld [vmem:[%s4] sm:$0x1]
      %v737 = vlaneseq
      %v738 = vshrl.u32 %v737, 7
      %v739 = vsub.s32 0, %v738
      %v740 = vrot.slane %v735, %v739
      %v758 = vunpack.c.l.b16 %v719
      %v759 = vunpack.c.l.b16 %v720
      %v760 = vunpack.c.l.b16 %v721
      %v761 = vunpack.c.l.b16 %v722
      %v762 = vunpack.c.l.b16 %v723
      %v763 = vunpack.c.l.b16 %v724
      %v764 = vunpack.c.l.b16 %v725
      %v765 = vunpack.c.l.b16 %v726
      %v766 = vunpack.c.l.b16 %v727
      %v767 = vunpack.c.l.b16 %v728
      %v768 = vunpack.c.l.b16 %v729
      %v769 = vunpack.c.l.b16 %v730
      %v770 = vunpack.c.l.b16 %v731
      %v771 = vunpack.c.l.b16 %v732
      %v772 = vunpack.c.l.b16 %v733
      %v773 = vunpack.c.l.b16 %v734
      %v774 = vpack.c.b16 %v759, %v758
      %v775 = vpack.c.b16 %v761, %v760
      %v776 = vpack.c.b16 %v763, %v762
      %v777 = vpack.c.b16 %v765, %v764
      %v778 = vpack.c.b16 %v767, %v766
      %v779 = vpack.c.b16 %v769, %v768
      %v780 = vpack.c.b16 %v771, %v770
      %v781 = vpack.c.b16 %v773, %v772
      %790 = vmatprep.subr.bf16.mxu0 0
      %791 = vmatpush1.bf16.msra.mxu0 %v774
      %792 = vmatprep.subr.bf16.mxu0 0
      %793 = vmatpush1.bf16.msra.mxu0 %v775
      %794 = vmatprep.subr.bf16.mxu0 0
      %795 = vmatpush1.bf16.msra.mxu0 %v776
      %796 = vmatprep.subr.bf16.mxu0 0
      %797 = vmatpush1.bf16.msra.mxu0 %v777
      %798 = vmatprep.subr.bf16.mxu0 0
      %799 = vmatpush1.bf16.msra.mxu0 %v778
      %800 = vmatprep.subr.bf16.mxu0 0
      %801 = vmatpush1.bf16.msra.mxu0 %v779
      %802 = vmatprep.subr.bf16.mxu0 0
      %803 = vmatpush1.bf16.msra.mxu0 %v780
      %804 = vmatprep.subr.bf16.mxu0 0
      %805 = vmatpush1.bf16.msra.mxu0 %v781
      %806 = vmatprep.subr.bf16.mxu0 0
      %807 = vmatpush1.bf16.msra.mxu0 0
      %808 = vmatprep.subr.bf16.mxu0 0
      %809 = vmatpush1.bf16.msra.mxu0 0
      %810 = vmatprep.subr.bf16.mxu0 0
      %811 = vmatpush1.bf16.msra.mxu0 0
      %812 = vmatprep.subr.bf16.mxu0 0
      %813 = vmatpush1.bf16.msra.mxu0 0
      %814 = vmatprep.subr.bf16.mxu0 0
      %815 = vmatpush1.bf16.msra.mxu0 0
      %816 = vmatprep.subr.bf16.mxu0 0
      %817 = vmatpush1.bf16.msra.mxu0 0
      %818 = vmatprep.subr.bf16.mxu0 0
      %819 = vmatpush1.bf16.msra.mxu0 0
      %820 = vmatprep.subr.bf16.mxu0 0
      %821 = vmatpush1.bf16.msra.mxu0 0
      %822 = vmatprep.mubr.bf16.mxu0 0
      %823 = vmatmul.mubr.bf16.gmra.mrb[0].mxu0 %v711
      %v824 = vpop.f32.mrb[0].mxu0
      %v825 = vadd.f32 %v740, %v824
      %v826 = vpop.f32.mrb[0].mxu0
      %v827 = vpop.f32.mrb[0].mxu0
      %v828 = vadd.f32 %v740, %v827
      %v829 = vpop.f32.mrb[0].mxu0
      %830 = vmatprep.mubr.bf16.mxu0 0
      %831 = vmatmul.mubr.bf16.gmra.mrb[0].mxu0 %v712
      %v832 = vpop.f32.mrb[0].mxu0
      %v833 = vadd.f32 %v740, %v832
      %v834 = vpop.f32.mrb[0].mxu0
      %v835 = vpop.f32.mrb[0].mxu0
      %v836 = vadd.f32 %v740, %v835
      %v837 = vpop.f32.mrb[0].mxu0
      %838 = vmatprep.mubr.bf16.mxu0 0
      %839 = vmatmul.mubr.bf16.gmra.mrb[0].mxu0 %v713
      %v840 = vpop.f32.mrb[0].mxu0
      %v841 = vadd.f32 %v740, %v840
      %v842 = vpop.f32.mrb[0].mxu0
      %v843 = vpop.f32.mrb[0].mxu0
      %v844 = vadd.f32 %v740, %v843
      %v845 = vpop.f32.mrb[0].mxu0
      %846 = vmatprep.mubr.bf16.mxu0 0
      %847 = vmatmul.mubr.bf16.gmra.mrb[0].mxu0 %v714
      %v848 = vpop.f32.mrb[0].mxu0
      %v849 = vadd.f32 %v740, %v848
      %v850 = vpop.f32.mrb[0].mxu0
      %v851 = vpop.f32.mrb[0].mxu0
      %v852 = vadd.f32 %v740, %v851
      %v853 = vpop.f32.mrb[0].mxu0
      %854 = vmatprep.mubr.bf16.mxu0 0
      %855 = vmatmul.mubr.bf16.gmra.mrb[0].mxu0 %v715
      %v856 = vpop.f32.mrb[0].mxu0
      %v857 = vadd.f32 %v740, %v856
      %v858 = vpop.f32.mrb[0].mxu0
      %v859 = vpop.f32.mrb[0].mxu0
      %v860 = vadd.f32 %v740, %v859
      %v861 = vpop.f32.mrb[0].mxu0
      %862 = vmatprep.mubr.bf16.mxu0 0
      %863 = vmatmul.mubr.bf16.gmra.mrb[0].mxu0 %v716
      %v864 = vpop.f32.mrb[0].mxu0
      %v865 = vadd.f32 %v740, %v864
      %v866 = vpop.f32.mrb[0].mxu0
      %v867 = vpop.f32.mrb[0].mxu0
      %v868 = vadd.f32 %v740, %v867
      %v869 = vpop.f32.mrb[0].mxu0
      %870 = vmatprep.mubr.bf16.mxu0 0
      %871 = vmatmul.mubr.bf16.gmra.mrb[0].mxu0 %v717
      %v872 = vpop.f32.mrb[0].mxu0
      %v873 = vadd.f32 %v740, %v872
      %v874 = vpop.f32.mrb[0].mxu0
      %v875 = vpop.f32.mrb[0].mxu0
      %v876 = vadd.f32 %v740, %v875
      %v877 = vpop.f32.mrb[0].mxu0
      %878 = vmatprep.mubr.bf16.mxu0 0
      %879 = vmatmul.mubr.bf16.gmra.mrb[0].mxu0 %v718
      %v880 = vpop.f32.mrb[0].mxu0
      %v881 = vadd.f32 %v740, %v880
      %v882 = vpop.f32.mrb[0].mxu0
      %v883 = vpop.f32.mrb[0].mxu0
      %v884 = vadd.f32 %v740, %v883
      %v885 = vpop.f32.mrb[0].mxu0
      %886 = vdwg.mxu0
      %v887 = vmax.f32 %v825, 0.0
      %v888 = vmax.f32 %v828, 0.0
      %v889 = vmax.f32 %v833, 0.0
      %v890 = vmax.f32 %v836, 0.0
      %v891 = vmax.f32 %v841, 0.0
      %v892 = vmax.f32 %v844, 0.0
      %v893 = vmax.f32 %v849, 0.0
      %v894 = vmax.f32 %v852, 0.0
      %v895 = vmax.f32 %v857, 0.0
      %v896 = vmax.f32 %v860, 0.0
      %v897 = vmax.f32 %v865, 0.0
      %v898 = vmax.f32 %v868, 0.0
      %v899 = vmax.f32 %v873, 0.0
      %v900 = vmax.f32 %v876, 0.0
      %v901 = vmax.f32 %v881, 0.0
      %v902 = vmax.f32 %v884, 0.0
      %v903 = vpack.c.bf16 %v888, %v887
      %v904 = vpack.c.bf16 %v890, %v889
      %v905 = vpack.c.bf16 %v892, %v891
      %v906 = vpack.c.bf16 %v894, %v893
      %v907 = vpack.c.bf16 %v896, %v895
      %v908 = vpack.c.bf16 %v898, %v897
      %v909 = vpack.c.bf16 %v900, %v899
      %v910 = vpack.c.bf16 %v902, %v901
      %v911 = vld [vmem:[%s5] sm:$0xf]
      %v912 = vld [vmem:[%s5 + $0x4] sm:$0xf]
      %v913 = vld [vmem:[%s5 + $0x8] sm:$0xf]
      %v914 = vld [vmem:[%s5 + $0xc] sm:$0xf]
      %v915 = vld [vmem:[%s5 + $0x10] sm:$0xf]
      %v916 = vld [vmem:[%s5 + $0x14] sm:$0xf]
      %v917 = vld [vmem:[%s5 + $0x18] sm:$0xf]
      %v918 = vld [vmem:[%s5 + $0x1c] sm:$0xf]
      %v919 = vld [vmem:[%s5 + $0x20] sm:$0xf]
      %v920 = vld [vmem:[%s5 + $0x24] sm:$0xf]
      %v921 = vld [vmem:[%s5 + $0x28] sm:$0xf]
      %v922 = vld [vmem:[%s5 + $0x2c] sm:$0xf]
      %v923 = vld [vmem:[%s5 + $0x30] sm:$0xf]
      %v924 = vld [vmem:[%s5 + $0x34] sm:$0xf]
      %v925 = vld [vmem:[%s5 + $0x38] sm:$0xf]
      %v926 = vld [vmem:[%s5 + $0x3c] sm:$0xf]
      %v927 = vld [vmem:[#allocation3] sm:$0x1]
      %v929 = vlaneseq
      %v930 = vshrl.u32 %v929, 7
      %v931 = vsub.s32 0, %v930
      %v932 = vrot.slane %v927, %v931
      %v950 = vunpack.c.l.b16 %v911
      %v951 = vunpack.c.l.b16 %v912
      %v952 = vunpack.c.l.b16 %v913
      %v953 = vunpack.c.l.b16 %v914
      %v954 = vunpack.c.l.b16 %v915
      %v955 = vunpack.c.l.b16 %v916
      %v956 = vunpack.c.l.b16 %v917
      %v957 = vunpack.c.l.b16 %v918
      %v958 = vunpack.c.l.b16 %v919
      %v959 = vunpack.c.l.b16 %v920
      %v960 = vunpack.c.l.b16 %v921
      %v961 = vunpack.c.l.b16 %v922
      %v962 = vunpack.c.l.b16 %v923
      %v963 = vunpack.c.l.b16 %v924
      %v964 = vunpack.c.l.b16 %v925
      %v965 = vunpack.c.l.b16 %v926
      %v966 = vpack.c.b16 %v951, %v950
      %v967 = vpack.c.b16 %v953, %v952
      %v968 = vpack.c.b16 %v955, %v954
      %v969 = vpack.c.b16 %v957, %v956
      %v970 = vpack.c.b16 %v959, %v958
      %v971 = vpack.c.b16 %v961, %v960
      %v972 = vpack.c.b16 %v963, %v962
      %v973 = vpack.c.b16 %v965, %v964
      %982 = vmatprep.subr.bf16.mxu0 0
      %983 = vmatpush1.bf16.msra.mxu0 %v966
      %984 = vmatprep.subr.bf16.mxu0 0
      %985 = vmatpush1.bf16.msra.mxu0 %v967
      %986 = vmatprep.subr.bf16.mxu0 0
      %987 = vmatpush1.bf16.msra.mxu0 %v968
      %988 = vmatprep.subr.bf16.mxu0 0
      %989 = vmatpush1.bf16.msra.mxu0 %v969
      %990 = vmatprep.subr.bf16.mxu0 0
      %991 = vmatpush1.bf16.msra.mxu0 %v970
      %992 = vmatprep.subr.bf16.mxu0 0
      %993 = vmatpush1.bf16.msra.mxu0 %v971
      %994 = vmatprep.subr.bf16.mxu0 0
      %995 = vmatpush1.bf16.msra.mxu0 %v972
      %996 = vmatprep.subr.bf16.mxu0 0
      %997 = vmatpush1.bf16.msra.mxu0 %v973
      %998 = vmatprep.subr.bf16.mxu0 0
      %999 = vmatpush1.bf16.msra.mxu0 0
      %1000 = vmatprep.subr.bf16.mxu0 0
      %1001 = vmatpush1.bf16.msra.mxu0 0
      %1002 = vmatprep.subr.bf16.mxu0 0
      %1003 = vmatpush1.bf16.msra.mxu0 0
      %1004 = vmatprep.subr.bf16.mxu0 0
      %1005 = vmatpush1.bf16.msra.mxu0 0
      %1006 = vmatprep.subr.bf16.mxu0 0
      %1007 = vmatpush1.bf16.msra.mxu0 0
      %1008 = vmatprep.subr.bf16.mxu0 0
      %1009 = vmatpush1.bf16.msra.mxu0 0
      %1010 = vmatprep.subr.bf16.mxu0 0
      %1011 = vmatpush1.bf16.msra.mxu0 0
      %1012 = vmatprep.subr.bf16.mxu0 0
      %1013 = vmatpush1.bf16.msra.mxu0 0
      %1014 = vmatprep.mubr.bf16.mxu0 0
      %1015 = vmatmul.mubr.bf16.gmra.mrb[0].mxu0 %v903
      %v1016 = vpop.f32.mrb[0].mxu0
      %v1017 = vadd.f32 %v932, %v1016
      %v1018 = vpop.f32.mrb[0].mxu0
      %v1019 = vpop.f32.mrb[0].mxu0
      %v1020 = vadd.f32 %v932, %v1019
      %v1021 = vpop.f32.mrb[0].mxu0
      %1022 = vmatprep.mubr.bf16.mxu0 0
      %1023 = vmatmul.mubr.bf16.gmra.mrb[0].mxu0 %v904
      %v1024 = vpop.f32.mrb[0].mxu0
      %v1025 = vadd.f32 %v932, %v1024
      %v1026 = vpop.f32.mrb[0].mxu0
      %v1027 = vpop.f32.mrb[0].mxu0
      %v1028 = vadd.f32 %v932, %v1027
      %v1029 = vpop.f32.mrb[0].mxu0
      %1030 = vmatprep.mubr.bf16.mxu0 0
      %1031 = vmatmul.mubr.bf16.gmra.mrb[0].mxu0 %v905
      %v1032 = vpop.f32.mrb[0].mxu0
      %v1033 = vadd.f32 %v932, %v1032
      %v1034 = vpop.f32.mrb[0].mxu0
      %v1035 = vpop.f32.mrb[0].mxu0
      %v1036 = vadd.f32 %v932, %v1035
      %v1037 = vpop.f32.mrb[0].mxu0
      %1038 = vmatprep.mubr.bf16.mxu0 0
      %1039 = vmatmul.mubr.bf16.gmra.mrb[0].mxu0 %v906
      %v1040 = vpop.f32.mrb[0].mxu0
      %v1041 = vadd.f32 %v932, %v1040
      %v1042 = vpop.f32.mrb[0].mxu0
      %v1043 = vpop.f32.mrb[0].mxu0
      %v1044 = vadd.f32 %v932, %v1043
      %v1045 = vpop.f32.mrb[0].mxu0
      %1046 = vmatprep.mubr.bf16.mxu0 0
      %1047 = vmatmul.mubr.bf16.gmra.mrb[0].mxu0 %v907
      %v1048 = vpop.f32.mrb[0].mxu0
      %v1049 = vadd.f32 %v932, %v1048
      %v1050 = vpop.f32.mrb[0].mxu0
      %v1051 = vpop.f32.mrb[0].mxu0
      %v1052 = vadd.f32 %v932, %v1051
      %v1053 = vpop.f32.mrb[0].mxu0
      %1054 = vmatprep.mubr.bf16.mxu0 0
      %1055 = vmatmul.mubr.bf16.gmra.mrb[0].mxu0 %v908
      %v1056 = vpop.f32.mrb[0].mxu0
      %v1057 = vadd.f32 %v932, %v1056
      %v1058 = vpop.f32.mrb[0].mxu0
      %v1059 = vpop.f32.mrb[0].mxu0
      %v1060 = vadd.f32 %v932, %v1059
      %v1061 = vpop.f32.mrb[0].mxu0
      %1062 = vmatprep.mubr.bf16.mxu0 0
      %1063 = vmatmul.mubr.bf16.gmra.mrb[0].mxu0 %v909
      %v1064 = vpop.f32.mrb[0].mxu0
      %v1065 = vadd.f32 %v932, %v1064
      %v1066 = vpop.f32.mrb[0].mxu0
      %v1067 = vpop.f32.mrb[0].mxu0
      %v1068 = vadd.f32 %v932, %v1067
      %v1069 = vpop.f32.mrb[0].mxu0
      %1070 = vmatprep.mubr.bf16.mxu0 0
      %1071 = vmatmul.mubr.bf16.gmra.mrb[0].mxu0 %v910
      %v1072 = vpop.f32.mrb[0].mxu0
      %v1073 = vadd.f32 %v932, %v1072
      %v1074 = vpop.f32.mrb[0].mxu0
      %v1075 = vpop.f32.mrb[0].mxu0
      %v1076 = vadd.f32 %v932, %v1075
      %v1077 = vpop.f32.mrb[0].mxu0
      %1078 = vdwg.mxu0
      %vm1079 = vcmask 7168
      %1080 = vst.msk [vmem:[%s304] sm:$0xff] %vm1079, %v1017
      %1081 = vst.msk [vmem:[%s304 + $0x8] sm:$0xff] %vm1079, %v1020
      %1082 = vst.msk [vmem:[%s304 + $0x10] sm:$0xff] %vm1079, %v1025
      %1083 = vst.msk [vmem:[%s304 + $0x18] sm:$0xff] %vm1079, %v1028
      %1084 = vst.msk [vmem:[%s304 + $0x20] sm:$0xff] %vm1079, %v1033
      %1085 = vst.msk [vmem:[%s304 + $0x28] sm:$0xff] %vm1079, %v1036
      %1086 = vst.msk [vmem:[%s304 + $0x30] sm:$0xff] %vm1079, %v1041
      %1087 = vst.msk [vmem:[%s304 + $0x38] sm:$0xff] %vm1079, %v1044
      %1088 = vst.msk [vmem:[%s304 + $0x40] sm:$0xff] %vm1079, %v1049
      %1089 = vst.msk [vmem:[%s304 + $0x48] sm:$0xff] %vm1079, %v1052
      %1090 = vst.msk [vmem:[%s304 + $0x50] sm:$0xff] %vm1079, %v1057
      %1091 = vst.msk [vmem:[%s304 + $0x58] sm:$0xff] %vm1079, %v1060
      %1092 = vst.msk [vmem:[%s304 + $0x60] sm:$0xff] %vm1079, %v1065
      %1093 = vst.msk [vmem:[%s304 + $0x68] sm:$0xff] %vm1079, %v1068
      %1094 = vst.msk [vmem:[%s304 + $0x70] sm:$0xff] %vm1079, %v1073
      %1095 = vst.msk [vmem:[%s304 + $0x78] sm:$0xff] %vm1079, %v1076
      %s1096 = smul.u32 16, %s20
      %p1097 = scmp.lt.s32.totalorder %s1096, 31
      %s1098 = scalar_select %p1097, %s1096, 31
      %s1099 = smul.addr %s1098, 8
      %s1100 = scalar_lea.vmem %s7, %s1099
      // Predicated region
      $region49: #{tpu_custom_call.1} parent=47 // pred_check
        %p1101 = pneg %p195
      $region50: #{tpu_custom_call.1} parent=47 // pred_check_branch
        %1103 = sbr.rel (%p1101) target = $region52
      $region51: #{tpu_custom_call.1} parent=47 // pred_region
        %s1104 = smul.u32 16, %s20
      $region52: #{tpu_custom_call.1} parent=47 // pred_fallthru
        _
    $region48: #{tpu_custom_call.1} parent=5 // pred_fallthru
      _
    %p1105 = scmp.le.s32.totalorder 2, %s15
    // Predicated region
    $region53: #{tpu_custom_call.1} parent=5 // pred_check
      %p1106 = pneg %p1105
    $region54: #{tpu_custom_call.1} parent=5 // pred_check_branch
      %1108 = sbr.rel (%p1106) target = $region56
    $region55: #{tpu_custom_call.1} parent=5 // pred_region
      %s1109 = ssub.s32 %s15, 2
      // Predicated region
      $region57: #{tpu_custom_call.1} parent=55 // pred_check
        %p1110 = pneg %p201
      $region58: #{tpu_custom_call.1} parent=55 // pred_check_branch
        %1112 = sbr.rel (%p1110) target = $region60
      $region59: #{tpu_custom_call.1} parent=55 // pred_region
        %s1113 = smul.u32 16, %s21
        %p1114 = scmp.lt.s32.totalorder %s1113, 31
        %s1115 = scalar_select %p1114, %s1113, 31
        %s1116 = smul.addr %s1115, 8
        %s1117 = scalar_lea.vmem %s7, %s1116
      $region60: #{tpu_custom_call.1} parent=55 // pred_fallthru
        _
    $region56: #{tpu_custom_call.1} parent=5 // pred_fallthru
      _
  $region6: #{tpu_custom_call.1} parent=0 // loop_footer
    %s19 = sadd.s32 1, %s15
  $region7: #{tpu_custom_call.1} parent=0 // loop_footer_branch
    %14 = sbr.rel target = $region3
  $region8: #{tpu_custom_call.1} parent=0 // loop_exit
    _

</llo_original>
